<compile_context>
chip_gen: v7x
topology: tpu7x:2x2x1
jax: 0.10.0
libtpu: 0.0.40
codegen_flags: <defaults>
</compile_context>

<pallas_src>
import functools

import jax
import jax.numpy as jnp
from jax.experimental import pallas as pl
from jax.experimental.pallas import tpu as pltpu


def channel_attention_kernel(x_ref, w1_ref, w2_ref, o_ref, *, hw_valid,
                             needs_mask):
    # x_ref : (Bb, C, HWp) lane-dense block (HWp = H*W padded to 128-multiple)
    # w1_ref: (C, Cr)      first Linear weight, stored transposed (in, out)
    # w2_ref: (Cr, C)      second Linear weight, stored transposed (in, out)
    bb, c, hwp = x_ref.shape

    xb = x_ref[...]                       # single load of the tile (orig dtype)

    # Mean: fold the f32 cast into the reduction -- no block-sized f32 copy.
    # Zero-padded lanes contribute 0 to the sum; divide by the true H*W.
    ssum = jnp.sum(xb.astype(jnp.float32), axis=2)            # (Bb, C)
    avg = ssum * (1.0 / float(hw_valid))

    # Max is exact in the input dtype; only the (Bb, C) result is cast to f32.
    if needs_mask:
        lane = jax.lax.broadcasted_iota(jnp.int32, (bb, c, hwp), 2)
        neg = jnp.asarray(-jnp.inf, dtype=xb.dtype)
        mx = jnp.max(jnp.where(lane < hw_valid, xb, neg), axis=2)
    else:
        mx = jnp.max(xb, axis=2)
    mx = mx.astype(jnp.float32)                               # (Bb, C)

    w1 = w1_ref[...].astype(jnp.float32)
    w2 = w2_ref[...].astype(jnp.float32)

    # Shared 2-layer FC (no bias).  Two tiny independent matmul chains instead
    # of an axis-0 concatenate (avoids a sublane relayout through the XLU);
    # this path is noise next to the slab DMA, do not tune further.
    def fc(v):
        h = jnp.maximum(jnp.dot(v, w1, preferred_element_type=jnp.float32), 0.0)
        return jnp.dot(h, w2, preferred_element_type=jnp.float32)

    gate = jax.nn.sigmoid(fc(avg) + fc(mx))                   # (Bb, C) f32

    # Per-channel column broadcast over the lane axis; reuse the loaded tile.
    o_ref[...] = (xb * gate.astype(xb.dtype)[:, :, None]).astype(o_ref.dtype)


def _vmem_budget_bytes():
    """Scoped-VMEM budget derived from the hardware (generation-aware)."""
    phys = 64 << 20                       # conservative fallback (v7x per-TC)
    try:
        phys = int(pltpu.get_tpu_info().vmem_capacity_bytes)
    except Exception:
        pass
    # Use at most half of physical VMEM, never declare more than 64 MiB.
    return int(min(max(phys // 2, 8 << 20), 64 << 20))


def _pick_block_b(B, slab_bytes, target_block_bytes):
    """Largest divisor of B whose block fits the target.

    Preference order: (1) even number of grid steps >= 2 (keeps both v7x
    TensorCores equally busy), (2) >= 2 steps, (3) any fitting divisor.
    """
    divisors = [d for d in range(1, B + 1) if B % d == 0]
    fits = [d for d in divisors if d * slab_bytes <= target_block_bytes]
    if not fits:
        return 1
    even_multi = [d for d in fits if (B // d) >= 2 and (B // d) % 2 == 0]
    multi = [d for d in fits if (B // d) >= 2]
    if even_multi:
        return max(even_multi)
    if multi:
        return max(multi)
    return max(fits)


def channel_attention(x, w1, w2):
    """x: (B, C, H, W); w1: (C, C//r); w2: (C//r, C). Returns (B, C, H, W).

    Weights must be pre-transposed from PyTorch nn.Linear (out, in) layout to
    (in, out) so the kernel computes `v @ W^T` directly.
    """
    B, C, H, W = x.shape
    HW = H * W
    assert w1.ndim == 2 and w2.ndim == 2
    Cr = w1.shape[1]
    assert w1.shape == (C, Cr) and w2.shape == (Cr, C), (
        "weights must be pre-transposed to (in, out): w1=(C, C//r), w2=(C//r, C)")

    # Lane-dense flatten; pad HW up to a 128-lane multiple for unmasked stores.
    HWp = ((HW + 127) // 128) * 128
    needs_mask = HWp != HW
    x2 = x.reshape(B, C, HW)
    if needs_mask:
        x2 = jnp.pad(x2, ((0, 0), (0, 0), (0, HWp - HW)))

    slab_bytes = C * HWp * x.dtype.itemsize
    budget = _vmem_budget_bytes()
    target_block = budget // 6            # 2x in + 2x out buffers + headroom
    Bb = _pick_block_b(B, slab_bytes, target_block)
    grid = (B // Bb,)

    # VMEM budget for what the kernel actually holds: double-buffered in/out
    # blocks, (double-buffered) weights, pooled/gate f32 temporaries, the
    # masked-max temporary when padding is active, plus headroom.
    block_bytes = Bb * slab_bytes
    weight_bytes = (C * Cr + Cr * C) * w1.dtype.itemsize
    inter_bytes = 8 * Bb * C * 4 + (block_bytes if needs_mask else 0)
    vmem_limit = 4 * block_bytes + 4 * weight_bytes + inter_bytes + (2 << 20)
    vmem_limit = int(min(max(vmem_limit, 8 << 20), budget))

    kernel = functools.partial(
        channel_attention_kernel, hw_valid=HW, needs_mask=needs_mask)

    out = pl.pallas_call(
        kernel,
        out_shape=jax.ShapeDtypeStruct((B, C, HWp), x.dtype),
        grid_spec=pltpu.PrefetchScalarGridSpec(
            num_scalar_prefetch=0,
            grid=grid,
            in_specs=[
                pl.BlockSpec((Bb, C, HWp), lambda b: (b, 0, 0)),
                pl.BlockSpec((C, Cr), lambda b: (0, 0)),
                pl.BlockSpec((Cr, C), lambda b: (0, 0)),
            ],
            out_specs=pl.BlockSpec((Bb, C, HWp), lambda b: (b, 0, 0)),
        ),
        compiler_params=pltpu.CompilerParams(
            dimension_semantics=("parallel",),
            vmem_limit_bytes=vmem_limit),
    )(x2, w1, w2)

    if needs_mask:
        out = out[:, :, :HW]
    return out.reshape(B, C, H, W)


def channel_attention_ref(x, w1, w2):
    # Pure-JAX reference matching the PyTorch module.
    avg = x.mean(axis=(2, 3))
    mx = x.max(axis=(2, 3))

    def fc(v):
        return jnp.maximum(v @ w1, 0.0) @ w2

    s = jax.nn.sigmoid(fc(avg) + fc(mx))
    return x * s[:, :, None, None]


if __name__ == "__main__":
    base_key = jax.random.PRNGKey(0)

    def run_case(case_idx, B, C, H, W, reduction):
        Cr = max(C // reduction, 1)
        key = jax.random.fold_in(base_key, case_idx)
        kx, k1, k2 = jax.random.split(key, 3)
        x = jax.random.normal(kx, (B, C, H, W), dtype=jnp.float32)
        # nn.Linear weights are (out, in); pass the transposed (in, out) form.
        w1 = jax.random.normal(k1, (C, Cr), dtype=jnp.float32) * (1.0 / jnp.sqrt(C))
        w2 = jax.random.normal(k2, (Cr, C), dtype=jnp.float32) * (1.0 / jnp.sqrt(Cr))

        out = jax.block_until_ready(channel_attention(x, w1, w2))
        ref = channel_attention_ref(x, w1, w2)
        assert out.shape == (B, C, H, W)
        assert jnp.allclose(out, ref, atol=1e-5, rtol=1e-5), (
            f"mismatch vs reference for case B={B} C={C} H={H} W={W}")

    # Case 0: H*W = 256 (already a 128-lane multiple -> unpadded fast path).
    run_case(0, B=2, C=32, H=16, W=16, reduction=16)
    # Case 1: H*W = 196 (not a 128 multiple -> padded slab + masked max path).
    run_case(1, B=2, C=32, H=14, W=14, reduction=16)

    print("KERNEL_OK")
</pallas_src>

<mosaic_0001>
module attributes {stable_mosaic.version = 11 : i64} {
  func.func @channel_attention_kernel(%arg0: i32, %arg1: memref<1x32x256xf32, #tpu.memory_space<vmem>>, %arg2: memref<32x2xf32, #tpu.memory_space<vmem>>, %arg3: memref<2x32xf32, #tpu.memory_space<vmem>>, %arg4: memref<1x32x256xf32, #tpu.memory_space<vmem>>) attributes {dimension_semantics = [#tpu.dimension_semantics<parallel>], iteration_bounds = array<i64: 2>, scalar_prefetch = 0 : i64, scratch_operands = 0 : i64, tpu.core_type = #tpu.core_type<tc>, window_params = [{transform_indices = @transform_0, window_bounds = array<i64: 1, 32, 256>}, {pipeline_mode = #tpu.pipeline_mode<synchronous>, transform_indices = @transform_1, window_bounds = array<i64: 32, 2>}, {pipeline_mode = #tpu.pipeline_mode<synchronous>, transform_indices = @transform_2, window_bounds = array<i64: 2, 32>}, {transform_indices = @transform_3, window_bounds = array<i64: 1, 32, 256>}]} {
    %c0 = arith.constant 0 : index
    %c0_0 = arith.constant 0 : index
    %c0_1 = arith.constant 0 : index
    %0 = vector.load %arg1[%c0, %c0_0, %c0_1] : memref<1x32x256xf32, #tpu.memory_space<vmem>>, vector<1x32x256xf32>
    %cst = arith.constant dense<0.000000e+00> : vector<1x32xf32>
    %1 = vector.multi_reduction <add>, %0, %cst [2] : vector<1x32x256xf32> to vector<1x32xf32>
    %cst_2 = arith.constant 3.906250e-03 : f32
    %2 = vector.broadcast %cst_2 : f32 to vector<1x32xf32>
    %3 = arith.mulf %1, %2 : vector<1x32xf32>
    %cst_3 = arith.constant dense<0xFF800000> : vector<1x32xf32>
    %4 = vector.multi_reduction <maximumf>, %0, %cst_3 [2] : vector<1x32x256xf32> to vector<1x32xf32>
    %c0_4 = arith.constant 0 : index
    %c0_5 = arith.constant 0 : index
    %5 = vector.load %arg2[%c0_4, %c0_5] : memref<32x2xf32, #tpu.memory_space<vmem>>, vector<32x2xf32>
    %c0_6 = arith.constant 0 : index
    %c0_7 = arith.constant 0 : index
    %6 = vector.load %arg3[%c0_6, %c0_7] : memref<2x32xf32, #tpu.memory_space<vmem>>, vector<2x32xf32>
    %cst_8 = arith.constant dense<0.000000e+00> : vector<1x2xf32>
    %7 = tpu.matmul %3, %5, %cst_8 {dimension_numbers = #tpu.dot_dimension_numbers<[1], [0], [0], [1], [0, 0, 1, 1], [], []>} : vector<1x32xf32>, vector<32x2xf32>, vector<1x2xf32> -> vector<1x2xf32>
    %cst_9 = arith.constant 0.000000e+00 : f32
    %8 = vector.broadcast %cst_9 : f32 to vector<1x2xf32>
    %9 = arith.maximumf %7, %8 : vector<1x2xf32>
    %cst_10 = arith.constant dense<0.000000e+00> : vector<1x32xf32>
    %10 = tpu.matmul %9, %6, %cst_10 {dimension_numbers = #tpu.dot_dimension_numbers<[1], [0], [0], [1], [0, 0, 1, 1], [], []>} : vector<1x2xf32>, vector<2x32xf32>, vector<1x32xf32> -> vector<1x32xf32>
    %cst_11 = arith.constant dense<0.000000e+00> : vector<1x2xf32>
    %11 = tpu.matmul %4, %5, %cst_11 {dimension_numbers = #tpu.dot_dimension_numbers<[1], [0], [0], [1], [0, 0, 1, 1], [], []>} : vector<1x32xf32>, vector<32x2xf32>, vector<1x2xf32> -> vector<1x2xf32>
    %cst_12 = arith.constant 0.000000e+00 : f32
    %12 = vector.broadcast %cst_12 : f32 to vector<1x2xf32>
    %13 = arith.maximumf %11, %12 : vector<1x2xf32>
    %cst_13 = arith.constant dense<0.000000e+00> : vector<1x32xf32>
    %14 = tpu.matmul %13, %6, %cst_13 {dimension_numbers = #tpu.dot_dimension_numbers<[1], [0], [0], [1], [0, 0, 1, 1], [], []>} : vector<1x2xf32>, vector<2x32xf32>, vector<1x32xf32> -> vector<1x32xf32>
    %15 = arith.addf %10, %14 : vector<1x32xf32>
    %16 = arith.negf %15 : vector<1x32xf32>
    %17 = math.exp %16 : vector<1x32xf32>
    %cst_14 = arith.constant 1.000000e+00 : f32
    %18 = vector.broadcast %cst_14 : f32 to vector<1x32xf32>
    %19 = arith.addf %18, %17 : vector<1x32xf32>
    %20 = arith.divf %18, %19 : vector<1x32xf32>
    %21 = vector.shape_cast %20 : vector<1x32xf32> to vector<1x32x1xf32>
    %22 = vector.broadcast %21 : vector<1x32x1xf32> to vector<1x32x256xf32>
    %23 = arith.mulf %0, %22 : vector<1x32x256xf32>
    %c0_15 = arith.constant 0 : index
    %c0_16 = arith.constant 0 : index
    %c0_17 = arith.constant 0 : index
    %24 = vector.load %arg4[%c0_15, %c0_16, %c0_17] : memref<1x32x256xf32, #tpu.memory_space<vmem>>, vector<1x32x256xf32>
    tpu.vector_store %arg4[%c0_15, %c0_16, %c0_17], %23 {strides = array<i32>} : memref<1x32x256xf32, #tpu.memory_space<vmem>>, vector<1x32x256xf32>,
    return
  }
  func.func @transform_0(%arg0: i32) -> (i32, i32, i32) {
    %c0_i32 = arith.constant 0 : i32
    %c0_i32_0 = arith.constant 0 : i32
    %c0_i32_1 = arith.constant 0 : i32
    return %arg0, %c0_i32, %c0_i32_0 : i32, i32, i32
  }
  func.func @transform_1(%arg0: i32) -> (i32, i32) {
    %c0_i32 = arith.constant 0 : i32
    %c0_i32_0 = arith.constant 0 : i32
    %c0_i32_1 = arith.constant 0 : i32
    return %c0_i32, %c0_i32_0 : i32, i32
  }
  func.func @transform_2(%arg0: i32) -> (i32, i32) {
    %c0_i32 = arith.constant 0 : i32
    %c0_i32_0 = arith.constant 0 : i32
    %c0_i32_1 = arith.constant 0 : i32
    return %c0_i32, %c0_i32_0 : i32, i32
  }
  func.func @transform_3(%arg0: i32) -> (i32, i32, i32) {
    %c0_i32 = arith.constant 0 : i32
    %c0_i32_0 = arith.constant 0 : i32
    %c0_i32_1 = arith.constant 0 : i32
    return %arg0, %c0_i32, %c0_i32_0 : i32, i32, i32
  }
}

</mosaic_0001>

<llo_original>
// kernel: tpu_custom_call.1
$region0: #{tpu_custom_call.1}
  #allocation0 [shape = 'u32[]', space=smem, size = 0x4, offset = 0x4, fixed_abs, tag = 'smem constant byte address 0x4 - core index']
  #allocation1 [shape = 'u32[144,128]{1,0:T(1,128)}', space=vmem, size = 0x12000, scoped, tag = 'internal scratch']
  %s0 = inlined_call_operand.hbm [shape: f32[2,32,256], index: 0, kind: input, shape index: {}]
  %s1 = inlined_call_operand.vmem [shape: f32[32,2], index: 1, kind: input, shape index: {}]
  %s2 = inlined_call_operand.vmem [shape: f32[2,32], index: 2, kind: input, shape index: {}]
  %s3 = inlined_call_operand.hbm [shape: f32[2,32,256], index: 3, kind: output, shape index: {}]
  %s4 = sld [smem:[#allocation0]]
  $region49: #{tpu_custom_call.1} parent=0
    _
  %s6 = ssub.s32 1, %s4
  %s7 = scalar_select 0, %s6, %s4
  $region1: #{tpu_custom_call.1} parent=0
    #allocation2 [shape = 'u8[65536]{0}', space=vmem, size = 0x10000, scoped, tag = 'input window, operand 0']
    #allocation3 [shape = 's32[2]{0}', space=sflag, size = 0x8, scoped, tag = 'scoped memory for tpu_custom_call.1']
    #allocation4 [shape = 's32[2]{0}', space=sflag, size = 0x8, scoped, tag = 'scoped memory for tpu_custom_call.1']
    #allocation5 [shape = 'u8[65536]{0}', space=vmem, size = 0x10000, scoped, tag = 'output window, operand 0']
    %8 = vsyncpa [#allocation3], 0
    %s9 = scalar_lea.sflag [#allocation3], 1
    %10 = vsyncpa %s9, 0
    %11 = vsyncpa [#allocation4], 0
    %s12 = scalar_lea.sflag [#allocation4], 1
    %13 = vsyncpa %s12, 0
    loop: start=0, step=1, limit=4
    $region2: #{tpu_custom_call.1} parent=1 // loop_pre_header
      _
    $region3: #{tpu_custom_call.1} parent=1 // loop_header
      %s15 = sphi 0, %s19
      %p16 = scmp.ge.s32.totalorder %s15, 4
      %s25 = sphi 0, %s27
      %s28 = sphi 0, %s25
      %s29 = sphi 0, %s28
      %s45 = sphi 0, %s29
      %s49 = sphi 0, %s49
      %s51 = sphi 0, %s49
      %s52 = sphi 0, %s51
      %s66 = sphi 0, %s52
      %s70 = sphi 0, %s70
      %s72 = sphi 0, %s70
      %s73 = sphi 0, %s72
      %s87 = sphi 0, %s73
      %s93 = sphi 0, %s95
      %s96 = sphi 0, %s93
      %s97 = sphi 0, %s96
      %s113 = sphi 0, %s97
    $region4: #{tpu_custom_call.1} parent=1 // loop_header_branch
      %18 = sbr.rel (%p16) target = $region8
    $region5: #{tpu_custom_call.1} parent=1 // loop_body
      %s20 = ssub.s32 %s15, 1
      %s21 = ssub.s32 %s15, 2
      %s22 = sadd.s32 %s15, 1
      %s23 = ssub.s32 %s15, %s22
      %p24 = scmp.eq.s32.totalorder %s23, 0
      %s26 = sadd.s32 %s25, 1
      %s27 = scalar_select %p24, %s25, %s26
      %p30 = pneg %p24
      %p31 = scmp.eq.s32.totalorder %s15, 1
      %p32 = por %p30, %p31
      %p33 = scmp.ne.s32.totalorder %s25, %s28
      %p34 = scmp.eq.s32.totalorder %s15, 0
      %p35 = por %p33, %p34
      %p36 = scmp.ne.s32.totalorder %s25, %s28
      %p37 = scmp.eq.s32.totalorder %s20, 1
      %p38 = por %p36, %p37
      %p39 = scmp.ne.s32.totalorder %s28, %s29
      %p40 = scmp.eq.s32.totalorder %s20, 0
      %p41 = por %p39, %p40
      %p42 = scmp.ne.s32.totalorder %s28, %s29
      %p43 = scmp.eq.s32.totalorder %s21, 1
      %p44 = por %p42, %p43
      %p46 = scmp.ne.s32.totalorder %s29, %s45
      %p47 = scmp.eq.s32.totalorder %s21, 0
      %p48 = por %p46, %p47
      %s50 = sadd.s32 %s49, 1
      %p53 = scmp.eq.s32.totalorder %s15, 1
      %p54 = scmp.ne.s32.totalorder %s49, %s51
      %p55 = scmp.eq.s32.totalorder %s15, 0
      %p56 = por %p54, %p55
      %p57 = scmp.ne.s32.totalorder %s49, %s51
      %p58 = scmp.eq.s32.totalorder %s20, 1
      %p59 = por %p57, %p58
      %p60 = scmp.ne.s32.totalorder %s51, %s52
      %p61 = scmp.eq.s32.totalorder %s20, 0
      %p62 = por %p60, %p61
      %p63 = scmp.ne.s32.totalorder %s51, %s52
      %p64 = scmp.eq.s32.totalorder %s21, 1
      %p65 = por %p63, %p64
      %p67 = scmp.ne.s32.totalorder %s52, %s66
      %p68 = scmp.eq.s32.totalorder %s21, 0
      %p69 = por %p67, %p68
      %s71 = sadd.s32 %s70, 1
      %p74 = scmp.eq.s32.totalorder %s15, 1
      %p75 = scmp.ne.s32.totalorder %s70, %s72
      %p76 = scmp.eq.s32.totalorder %s15, 0
      %p77 = por %p75, %p76
      %p78 = scmp.ne.s32.totalorder %s70, %s72
      %p79 = scmp.eq.s32.totalorder %s20, 1
      %p80 = por %p78, %p79
      %p81 = scmp.ne.s32.totalorder %s72, %s73
      %p82 = scmp.eq.s32.totalorder %s20, 0
      %p83 = por %p81, %p82
      %p84 = scmp.ne.s32.totalorder %s72, %s73
      %p85 = scmp.eq.s32.totalorder %s21, 1
      %p86 = por %p84, %p85
      %p88 = scmp.ne.s32.totalorder %s73, %s87
      %p89 = scmp.eq.s32.totalorder %s21, 0
      %p90 = por %p88, %p89
      %s91 = ssub.s32 %s15, %s22
      %p92 = scmp.eq.s32.totalorder %s91, 0
      %s94 = sadd.s32 %s93, 1
      %s95 = scalar_select %p92, %s93, %s94
      %p98 = pneg %p92
      %p99 = scmp.eq.s32.totalorder %s15, 1
      %p100 = por %p98, %p99
      %p101 = scmp.ne.s32.totalorder %s93, %s96
      %p102 = scmp.eq.s32.totalorder %s15, 0
      %p103 = por %p101, %p102
      %p104 = scmp.ne.s32.totalorder %s93, %s96
      %p105 = scmp.eq.s32.totalorder %s20, 1
      %p106 = por %p104, %p105
      %p107 = scmp.ne.s32.totalorder %s96, %s97
      %p108 = scmp.eq.s32.totalorder %s20, 0
      %p109 = por %p107, %p108
      %p110 = scmp.ne.s32.totalorder %s96, %s97
      %p111 = scmp.eq.s32.totalorder %s21, 1
      %p112 = por %p110, %p111
      %p114 = scmp.ne.s32.totalorder %s97, %s113
      %p115 = scmp.eq.s32.totalorder %s21, 0
      %p116 = por %p114, %p115
      %p117 = scmp.le.s32.totalorder 1, %s15
      %p118 = scmp.lt.s32.totalorder %s15, 3
      %p119 = pnand %p117, %p118
      %p120 = pneg %p119
      // Predicated region
      $region9: #{tpu_custom_call.1} parent=5 // pred_check
        _
      $region10: #{tpu_custom_call.1} parent=5 // pred_check_branch
        %122 = sbr.rel (%p119) target = $region12
      $region11: #{tpu_custom_call.1} parent=5 // pred_region
        %s123 = ssub.s32 %s15, 1
        // Predicated region
        $region13: #{tpu_custom_call.1} parent=11 // pred_check
          %p124 = pneg %p62
        $region14: #{tpu_custom_call.1} parent=11 // pred_check_branch
          %126 = sbr.rel (%p124) target = $region16
        $region15: #{tpu_custom_call.1} parent=11 // pred_region
          _
        $region16: #{tpu_custom_call.1} parent=11 // pred_fallthru
          _
        // Predicated region
        $region17: #{tpu_custom_call.1} parent=11 // pred_check
          %p127 = pneg %p83
        $region18: #{tpu_custom_call.1} parent=11 // pred_check_branch
          %129 = sbr.rel (%p127) target = $region20
        $region19: #{tpu_custom_call.1} parent=11 // pred_region
          _
        $region20: #{tpu_custom_call.1} parent=11 // pred_fallthru
          _
      $region12: #{tpu_custom_call.1} parent=5 // pred_fallthru
        _
      %p130 = scmp.lt.s32.totalorder %s15, 2
      // Predicated region
      $region21: #{tpu_custom_call.1} parent=5 // pred_check
        %p131 = pneg %p130
      $region22: #{tpu_custom_call.1} parent=5 // pred_check_branch
        %133 = sbr.rel (%p131) target = $region24
      $region23: #{tpu_custom_call.1} parent=5 // pred_region
        // Predicated region
        $region25: #{tpu_custom_call.1} parent=23 // pred_check
          %p134 = pneg %p35
        $region26: #{tpu_custom_call.1} parent=23 // pred_check_branch
          %136 = sbr.rel (%p134) target = $region28
        $region27: #{tpu_custom_call.1} parent=23 // pred_region
          %s137 = sand.u32 %s25, 1
          %s138 = scalar_lea.sflag [#allocation3], %s137
          %s139 = sand.u32 %s25, 1
          %s140 = smul.addr %s139, 64
          %s141 = scalar_lea.vmem [#allocation2], %s140
          %s143 = ssub.s32 1024, 1024
          %144 = vsyncadd %s138, %s143
          %s145 = smul.addr %s15, 8
          %s146 = smul.addr %s145, 128
          %s147 = scalar_lea.hbm %s0, %s146
          %s148 = sshll.u32 %s141, 4
          %s149 = int_to_ptr.vmem [resolvable:$true] %s148
          %154 = dma.hbm_to_vmem [thread:$0]  %s147, 1024, %s149, %s138, 256, 256, 16
        $region28: #{tpu_custom_call.1} parent=23 // pred_fallthru
          _
      $region24: #{tpu_custom_call.1} parent=5 // pred_fallthru
        _
      %p155 = scmp.le.s32.totalorder 1, %s15
      %p156 = scmp.lt.s32.totalorder %s15, 3
      %p157 = pnand %p155, %p156
      %p158 = pneg %p157
      // Predicated region
      $region29: #{tpu_custom_call.1} parent=5 // pred_check
        _
      $region30: #{tpu_custom_call.1} parent=5 // pred_check_branch
        %160 = sbr.rel (%p157) target = $region32
      $region31: #{tpu_custom_call.1} parent=5 // pred_region
        %s161 = ssub.s32 %s15, 1
        %s162 = sand.u32 %s28, 1
        %s163 = scalar_lea.sflag [#allocation3], %s162
        %s164 = sand.u32 %s28, 1
        %s165 = smul.addr %s164, 64
        %s166 = scalar_lea.vmem [#allocation2], %s165
        // Predicated region
        $region33: #{tpu_custom_call.1} parent=31 // pred_check
          %p167 = pneg %p41
        $region34: #{tpu_custom_call.1} parent=31 // pred_check_branch
          %169 = sbr.rel (%p167) target = $region36
        $region35: #{tpu_custom_call.1} parent=31 // pred_region
          %170 = dma.done %s163, 1024
        $region36: #{tpu_custom_call.1} parent=31 // pred_fallthru
          _
        %s171 = sand.u32 %s28, 1
        %s172 = scalar_lea.sflag [#allocation3], %s171
        %s173 = sand.u32 %s28, 1
        %s174 = smul.addr %s173, 64
        %s175 = scalar_lea.vmem [#allocation2], %s174
        %p176 = pneg %p41
        %p177 = pneg %p38
        %p178 = pneg %p62
        %p179 = pneg %p59
        %p180 = pneg %p83
        %p181 = pneg %p80
        %p182 = pneg %p109
        %p183 = pneg %p106
        %s184 = sand.u32 %s96, 1
        %s185 = scalar_lea.sflag [#allocation4], %s184
        %s186 = sand.u32 %s96, 1
        %s187 = smul.addr %s186, 64
        %s188 = scalar_lea.vmem [#allocation5], %s187
        %v189 = vld [vmem:[%s166] sm:$0xff]
        %v190 = vld [vmem:[%s166 + $0x8] sm:$0xff]
        %v191 = vld [vmem:[%s166 + $0x10] sm:$0xff]
        %v192 = vld [vmem:[%s166 + $0x18] sm:$0xff]
        %v193 = vld [vmem:[%s166 + $0x20] sm:$0xff]
        %v194 = vld [vmem:[%s166 + $0x28] sm:$0xff]
        %v195 = vld [vmem:[%s166 + $0x30] sm:$0xff]
        %v196 = vld [vmem:[%s166 + $0x38] sm:$0xff]
        %v197 = vadd.f32 %v189, %v190
        %198 = vadd.xlane.f32.xlu0 %v197
        %v199 = vpop.xlane.xlu0 %198
        %v200 = vadd.f32 %v191, %v192
        %201 = vadd.xlane.f32.xlu0 %v200
        %v202 = vpop.xlane.xlu0 %201
        %v203 = vadd.f32 %v193, %v194
        %204 = vadd.xlane.f32.xlu0 %v203
        %v205 = vpop.xlane.xlu0 %204
        %v206 = vadd.f32 %v195, %v196
        %207 = vadd.xlane.f32.xlu0 %v206
        %v208 = vpop.xlane.xlu0 %207
        %v209 = vmul.f32 %v199, 0.00390625
        %v210 = vmul.f32 %v202, 0.00390625
        %v211 = vmul.f32 %v205, 0.00390625
        %v212 = vmul.f32 %v208, 0.00390625
        %v213 = vmax.f32 %v189, %v190
        %214 = vmax.xlane.f32.xlu0 %v213
        %v215 = vpop.xlane.xlu0 %214
        %v216 = vmax.f32 %v191, %v192
        %217 = vmax.xlane.f32.xlu0 %v216
        %v218 = vpop.xlane.xlu0 %217
        %v219 = vmax.f32 %v193, %v194
        %220 = vmax.xlane.f32.xlu0 %v219
        %v221 = vpop.xlane.xlu0 %220
        %v222 = vmax.f32 %v195, %v196
        %223 = vmax.xlane.f32.xlu0 %v222
        %v224 = vpop.xlane.xlu0 %223
        %v225 = vld [vmem:[%s1] sm:$0xff]
        %v226 = vld [vmem:[%s1 + $0x8] sm:$0xff]
        %v227 = vld [vmem:[%s1 + $0x10] sm:$0xff]
        %v228 = vld [vmem:[%s1 + $0x18] sm:$0xff]
        %v229 = vld [vmem:[%s2] sm:$0x3]
        %v234 = vlaneseq
        %v235 = vand.u32 %v234, 127
        %v236 = vlaneseq
        %v237 = vshrl.u32 %v236, 7
        %v238 = vsub.s32 %v235, %v237
        %v239 = vrot.slane %v209, %v238
        %v240 = vadd.s32 %v235, 4294967288
        %v241 = vlaneseq
        %v242 = vshrl.u32 %v241, 7
        %v243 = vsub.s32 %v240, %v242
        %v244 = vrot.slane %v210, %v243
        %vm245 = vcmask 130112
        %v246 = vsel %vm245, %v244, %v239
        %v247 = vadd.s32 %v235, 4294967280
        %v248 = vlaneseq
        %v249 = vshrl.u32 %v248, 7
        %v250 = vsub.s32 %v247, %v249
        %v251 = vrot.slane %v211, %v250
        %vm252 = vcmask 195712
        %v253 = vsel %vm252, %v251, %v246
        %v254 = vadd.s32 %v235, 4294967272
        %v255 = vlaneseq
        %v256 = vshrl.u32 %v255, 7
        %v257 = vsub.s32 %v254, %v256
        %v258 = vrot.slane %v212, %v257
        %vm259 = vcmask 261312
        %v260 = vsel %vm259, %v258, %v253
        %vm261 = vcmask 261120
        %v262 = vsel %vm261, %v260, 0
        %264 = vmatprep.subr.mxu0 0.0
        %265 = vmatpush1.msra.mxu0 %v225
        %266 = vmatprep.subr.mxu0 0.0
        %267 = vmatpush1.msra.mxu0 %v226
        %268 = vmatprep.subr.mxu0 0.0
        %269 = vmatpush1.msra.mxu0 %v227
        %270 = vmatprep.subr.mxu0 0.0
        %271 = vmatpush1.msra.mxu0 %v228
        %272 = vmatprep.subr.mxu0 0.0
        %273 = vmatpush1.msra.mxu0 0.0
        %274 = vmatprep.subr.mxu0 0.0
        %275 = vmatpush1.msra.mxu0 0.0
        %276 = vmatprep.subr.mxu0 0.0
        %277 = vmatpush1.msra.mxu0 0.0
        %278 = vmatprep.subr.mxu0 0.0
        %279 = vmatpush1.msra.mxu0 0.0
        %280 = vmatprep.subr.mxu0 0.0
        %281 = vmatpush1.msra.mxu0 0.0
        %282 = vmatprep.subr.mxu0 0.0
        %283 = vmatpush1.msra.mxu0 0.0
        %284 = vmatprep.subr.mxu0 0.0
        %285 = vmatpush1.msra.mxu0 0.0
        %286 = vmatprep.subr.mxu0 0.0
        %287 = vmatpush1.msra.mxu0 0.0
        %288 = vmatprep.subr.mxu0 0.0
        %289 = vmatpush1.msra.mxu0 0.0
        %290 = vmatprep.subr.mxu0 0.0
        %291 = vmatpush1.msra.mxu0 0.0
        %292 = vmatprep.subr.mxu0 0.0
        %293 = vmatpush1.msra.mxu0 0.0
        %294 = vmatprep.subr.mxu0 0.0
        %295 = vmatpush1.msra.mxu0 0.0
        %296 = vmatprep.subr.mxu0 0.0
        %297 = vmatpush1.msra.mxu0 0.0
        %298 = vmatprep.subr.mxu0 0.0
        %299 = vmatpush1.msra.mxu0 0.0
        %300 = vmatprep.subr.mxu0 0.0
        %301 = vmatpush1.msra.mxu0 0.0
        %302 = vmatprep.subr.mxu0 0.0
        %303 = vmatpush1.msra.mxu0 0.0
        %304 = vmatprep.subr.mxu0 0.0
        %305 = vmatpush1.msra.mxu0 0.0
        %306 = vmatprep.subr.mxu0 0.0
        %307 = vmatpush1.msra.mxu0 0.0
        %308 = vmatprep.subr.mxu0 0.0
        %309 = vmatpush1.msra.mxu0 0.0
        %310 = vmatprep.subr.mxu0 0.0
        %311 = vmatpush1.msra.mxu0 0.0
        %312 = vmatprep.subr.mxu0 0.0
        %313 = vmatpush1.msra.mxu0 0.0
        %314 = vmatprep.subr.mxu0 0.0
        %315 = vmatpush1.msra.mxu0 0.0
        %316 = vmatprep.subr.mxu0 0.0
        %317 = vmatpush1.msra.mxu0 0.0
        %318 = vmatprep.subr.mxu0 0.0
        %319 = vmatpush1.msra.mxu0 0.0
        %320 = vmatprep.subr.mxu0 0.0
        %321 = vmatpush1.msra.mxu0 0.0
        %322 = vmatprep.subr.mxu0 0.0
        %323 = vmatpush1.msra.mxu0 0.0
        %324 = vmatprep.subr.mxu0 0.0
        %325 = vmatpush1.msra.mxu0 0.0
        %326 = vmatprep.subr.mxu0 0.0
        %327 = vmatpush1.msra.mxu0 0.0
        %328 = vmatprep.mubr.f32.mxu0 0.0
        %329 = vmatmul.mubr.f32.gmra.mrb[0].mxu0 %v262
        %v330 = vpop.f32.mrb[0].mxu0
        %v331 = vadd.f32 0.0, %v330
        %v332 = vpop.f32.mrb[0].mxu0
        %333 = vdwg.mxu0
        %v334 = vmax.f32 %v331, 0.0
        %v339 = vlaneseq
        %v340 = vshrl.u32 %v339, 7
        %v341 = vsub.s32 %v235, %v340
        %v342 = vrot.slane %v215, %v341
        %v343 = vlaneseq
        %v344 = vshrl.u32 %v343, 7
        %v345 = vsub.s32 %v240, %v344
        %v346 = vrot.slane %v218, %v345
        %v347 = vsel %vm245, %v346, %v342
        %v348 = vlaneseq
        %v349 = vshrl.u32 %v348, 7
        %v350 = vsub.s32 %v247, %v349
        %v351 = vrot.slane %v221, %v350
        %v352 = vsel %vm252, %v351, %v347
        %v353 = vlaneseq
        %v354 = vshrl.u32 %v353, 7
        %v355 = vsub.s32 %v254, %v354
        %v356 = vrot.slane %v224, %v355
        %v357 = vsel %vm259, %v356, %v352
        %v358 = vsel %vm261, %v357, 0
        %360 = vmatprep.subr.mxu0 0.0
        %361 = vmatpush1.msra.mxu0 %v225
        %362 = vmatprep.subr.mxu0 0.0
        %363 = vmatpush1.msra.mxu0 %v226
        %364 = vmatprep.subr.mxu0 0.0
        %365 = vmatpush1.msra.mxu0 %v227
        %366 = vmatprep.subr.mxu0 0.0
        %367 = vmatpush1.msra.mxu0 %v228
        %368 = vmatprep.subr.mxu0 0.0
        %369 = vmatpush1.msra.mxu0 0.0
        %370 = vmatprep.subr.mxu0 0.0
        %371 = vmatpush1.msra.mxu0 0.0
        %372 = vmatprep.subr.mxu0 0.0
        %373 = vmatpush1.msra.mxu0 0.0
        %374 = vmatprep.subr.mxu0 0.0
        %375 = vmatpush1.msra.mxu0 0.0
        %376 = vmatprep.subr.mxu0 0.0
        %377 = vmatpush1.msra.mxu0 0.0
        %378 = vmatprep.subr.mxu0 0.0
        %379 = vmatpush1.msra.mxu0 0.0
        %380 = vmatprep.subr.mxu0 0.0
        %381 = vmatpush1.msra.mxu0 0.0
        %382 = vmatprep.subr.mxu0 0.0
        %383 = vmatpush1.msra.mxu0 0.0
        %384 = vmatprep.subr.mxu0 0.0
        %385 = vmatpush1.msra.mxu0 0.0
        %386 = vmatprep.subr.mxu0 0.0
        %387 = vmatpush1.msra.mxu0 0.0
        %388 = vmatprep.subr.mxu0 0.0
        %389 = vmatpush1.msra.mxu0 0.0
        %390 = vmatprep.subr.mxu0 0.0
        %391 = vmatpush1.msra.mxu0 0.0
        %392 = vmatprep.subr.mxu0 0.0
        %393 = vmatpush1.msra.mxu0 0.0
        %394 = vmatprep.subr.mxu0 0.0
        %395 = vmatpush1.msra.mxu0 0.0
        %396 = vmatprep.subr.mxu0 0.0
        %397 = vmatpush1.msra.mxu0 0.0
        %398 = vmatprep.subr.mxu0 0.0
        %399 = vmatpush1.msra.mxu0 0.0
        %400 = vmatprep.subr.mxu0 0.0
        %401 = vmatpush1.msra.mxu0 0.0
        %402 = vmatprep.subr.mxu0 0.0
        %403 = vmatpush1.msra.mxu0 0.0
        %404 = vmatprep.subr.mxu0 0.0
        %405 = vmatpush1.msra.mxu0 0.0
        %406 = vmatprep.subr.mxu0 0.0
        %407 = vmatpush1.msra.mxu0 0.0
        %408 = vmatprep.subr.mxu0 0.0
        %409 = vmatpush1.msra.mxu0 0.0
        %410 = vmatprep.subr.mxu0 0.0
        %411 = vmatpush1.msra.mxu0 0.0
        %412 = vmatprep.subr.mxu0 0.0
        %413 = vmatpush1.msra.mxu0 0.0
        %414 = vmatprep.subr.mxu0 0.0
        %415 = vmatpush1.msra.mxu0 0.0
        %416 = vmatprep.subr.mxu0 0.0
        %417 = vmatpush1.msra.mxu0 0.0
        %418 = vmatprep.subr.mxu0 0.0
        %419 = vmatpush1.msra.mxu0 0.0
        %420 = vmatprep.subr.mxu0 0.0
        %421 = vmatpush1.msra.mxu0 0.0
        %422 = vmatprep.subr.mxu0 0.0
        %423 = vmatpush1.msra.mxu0 0.0
        %424 = vmatprep.mubr.f32.mxu0 0.0
        %425 = vmatmul.mubr.f32.gmra.mrb[0].mxu0 %v358
        %v426 = vpop.f32.mrb[0].mxu0
        %v427 = vadd.f32 0.0, %v426
        %v428 = vpop.f32.mrb[0].mxu0
        %429 = vdwg.mxu0
        %v430 = vmax.f32 %v427, 0.0
        %vm431 = vcmask 15360
        %v433 = vsel %vm431, %v430, 0
        %vm435 = vcmask 1041408
        %v437 = vsel %vm435, %v229, 0
        %439 = vmatprep.subr.mxu0 0.0
        %440 = vmatpush1.msra.mxu0 %v437
        %441 = vmatprep.subr.mxu0 0.0
        %442 = vmatpush1.msra.mxu0 0.0
        %443 = vmatprep.subr.mxu0 0.0
        %444 = vmatpush1.msra.mxu0 0.0
        %445 = vmatprep.subr.mxu0 0.0
        %446 = vmatpush1.msra.mxu0 0.0
        %447 = vmatprep.subr.mxu0 0.0
        %448 = vmatpush1.msra.mxu0 0.0
        %449 = vmatprep.subr.mxu0 0.0
        %450 = vmatpush1.msra.mxu0 0.0
        %451 = vmatprep.subr.mxu0 0.0
        %452 = vmatpush1.msra.mxu0 0.0
        %453 = vmatprep.subr.mxu0 0.0
        %454 = vmatpush1.msra.mxu0 0.0
        %455 = vmatprep.subr.mxu0 0.0
        %456 = vmatpush1.msra.mxu0 0.0
        %457 = vmatprep.subr.mxu0 0.0
        %458 = vmatpush1.msra.mxu0 0.0
        %459 = vmatprep.subr.mxu0 0.0
        %460 = vmatpush1.msra.mxu0 0.0
        %461 = vmatprep.subr.mxu0 0.0
        %462 = vmatpush1.msra.mxu0 0.0
        %463 = vmatprep.subr.mxu0 0.0
        %464 = vmatpush1.msra.mxu0 0.0
        %465 = vmatprep.subr.mxu0 0.0
        %466 = vmatpush1.msra.mxu0 0.0
        %467 = vmatprep.subr.mxu0 0.0
        %468 = vmatpush1.msra.mxu0 0.0
        %469 = vmatprep.subr.mxu0 0.0
        %470 = vmatpush1.msra.mxu0 0.0
        %471 = vmatprep.subr.mxu0 0.0
        %472 = vmatpush1.msra.mxu0 0.0
        %473 = vmatprep.subr.mxu0 0.0
        %474 = vmatpush1.msra.mxu0 0.0
        %475 = vmatprep.subr.mxu0 0.0
        %476 = vmatpush1.msra.mxu0 0.0
        %477 = vmatprep.subr.mxu0 0.0
        %478 = vmatpush1.msra.mxu0 0.0
        %479 = vmatprep.subr.mxu0 0.0
        %480 = vmatpush1.msra.mxu0 0.0
        %481 = vmatprep.subr.mxu0 0.0
        %482 = vmatpush1.msra.mxu0 0.0
        %483 = vmatprep.subr.mxu0 0.0
        %484 = vmatpush1.msra.mxu0 0.0
        %485 = vmatprep.subr.mxu0 0.0
        %486 = vmatpush1.msra.mxu0 0.0
        %487 = vmatprep.subr.mxu0 0.0
        %488 = vmatpush1.msra.mxu0 0.0
        %489 = vmatprep.subr.mxu0 0.0
        %490 = vmatpush1.msra.mxu0 0.0
        %491 = vmatprep.subr.mxu0 0.0
        %492 = vmatpush1.msra.mxu0 0.0
        %493 = vmatprep.subr.mxu0 0.0
        %494 = vmatpush1.msra.mxu0 0.0
        %495 = vmatprep.subr.mxu0 0.0
        %496 = vmatpush1.msra.mxu0 0.0
        %497 = vmatprep.subr.mxu0 0.0
        %498 = vmatpush1.msra.mxu0 0.0
        %499 = vmatprep.subr.mxu0 0.0
        %500 = vmatpush1.msra.mxu0 0.0
        %501 = vmatprep.subr.mxu0 0.0
        %502 = vmatpush1.msra.mxu0 0.0
        %503 = vmatprep.mubr.f32.mxu0 0.0
        %504 = vmatmul.mubr.f32.gmra.mrb[0].mxu0 %v433
        %v505 = vpop.f32.mrb[0].mxu0
        %v506 = vadd.f32 0.0, %v505
        %v507 = vpop.f32.mrb[0].mxu0
        %508 = vdwg.mxu0
        %v510 = vsel %vm431, %v334, 0
        %512 = vmatprep.subr.mxu0 0.0
        %513 = vmatpush1.msra.mxu0 %v437
        %514 = vmatprep.subr.mxu0 0.0
        %515 = vmatpush1.msra.mxu0 0.0
        %516 = vmatprep.subr.mxu0 0.0
        %517 = vmatpush1.msra.mxu0 0.0
        %518 = vmatprep.subr.mxu0 0.0
        %519 = vmatpush1.msra.mxu0 0.0
        %520 = vmatprep.subr.mxu0 0.0
        %521 = vmatpush1.msra.mxu0 0.0
        %522 = vmatprep.subr.mxu0 0.0
        %523 = vmatpush1.msra.mxu0 0.0
        %524 = vmatprep.subr.mxu0 0.0
        %525 = vmatpush1.msra.mxu0 0.0
        %526 = vmatprep.subr.mxu0 0.0
        %527 = vmatpush1.msra.mxu0 0.0
        %528 = vmatprep.subr.mxu0 0.0
        %529 = vmatpush1.msra.mxu0 0.0
        %530 = vmatprep.subr.mxu0 0.0
        %531 = vmatpush1.msra.mxu0 0.0
        %532 = vmatprep.subr.mxu0 0.0
        %533 = vmatpush1.msra.mxu0 0.0
        %534 = vmatprep.subr.mxu0 0.0
        %535 = vmatpush1.msra.mxu0 0.0
        %536 = vmatprep.subr.mxu0 0.0
        %537 = vmatpush1.msra.mxu0 0.0
        %538 = vmatprep.subr.mxu0 0.0
        %539 = vmatpush1.msra.mxu0 0.0
        %540 = vmatprep.subr.mxu0 0.0
        %541 = vmatpush1.msra.mxu0 0.0
        %542 = vmatprep.subr.mxu0 0.0
        %543 = vmatpush1.msra.mxu0 0.0
        %544 = vmatprep.subr.mxu0 0.0
        %545 = vmatpush1.msra.mxu0 0.0
        %546 = vmatprep.subr.mxu0 0.0
        %547 = vmatpush1.msra.mxu0 0.0
        %548 = vmatprep.subr.mxu0 0.0
        %549 = vmatpush1.msra.mxu0 0.0
        %550 = vmatprep.subr.mxu0 0.0
        %551 = vmatpush1.msra.mxu0 0.0
        %552 = vmatprep.subr.mxu0 0.0
        %553 = vmatpush1.msra.mxu0 0.0
        %554 = vmatprep.subr.mxu0 0.0
        %555 = vmatpush1.msra.mxu0 0.0
        %556 = vmatprep.subr.mxu0 0.0
        %557 = vmatpush1.msra.mxu0 0.0
        %558 = vmatprep.subr.mxu0 0.0
        %559 = vmatpush1.msra.mxu0 0.0
        %560 = vmatprep.subr.mxu0 0.0
        %561 = vmatpush1.msra.mxu0 0.0
        %562 = vmatprep.subr.mxu0 0.0
        %563 = vmatpush1.msra.mxu0 0.0
        %564 = vmatprep.subr.mxu0 0.0
        %565 = vmatpush1.msra.mxu0 0.0
        %566 = vmatprep.subr.mxu0 0.0
        %567 = vmatpush1.msra.mxu0 0.0
        %568 = vmatprep.subr.mxu0 0.0
        %569 = vmatpush1.msra.mxu0 0.0
        %570 = vmatprep.subr.mxu0 0.0
        %571 = vmatpush1.msra.mxu0 0.0
        %572 = vmatprep.subr.mxu0 0.0
        %573 = vmatpush1.msra.mxu0 0.0
        %574 = vmatprep.subr.mxu0 0.0
        %575 = vmatpush1.msra.mxu0 0.0
        %576 = vmatprep.mubr.f32.mxu0 0.0
        %577 = vmatmul.mubr.f32.gmra.mrb[0].mxu0 %v510
        %v578 = vpop.f32.mrb[0].mxu0
        %v579 = vadd.f32 %v506, %v578
        %v580 = vpop.f32.mrb[0].mxu0
        %581 = vdwg.mxu0
        %v582 = vxor.u32 %v579, 2147483648
        %v583 = vmul.f32 %v582, 1.442695
        %v584 = vpow.pop %v583
        %v585 = vadd.f32 %v584, 1.0
        %v586 = vrcp.pop %v585
        %v587 = vmul.f32 1.0, %v586
        %v588 = vlaneseq
        %v589 = vshrl.u32 %v588, 7
        %v590 = vsub.s32 0, %v589
        %v591 = vrot.slane %v587, %v590
        %593 = vbcast.lane.b32.xlu0 %v591, 256
        %v594 = vpop.permute.xlu0 %593
        %s596 = sor.u32 256, 8
        %597 = vbcast.lane.b32.xlu0 %v591, %s596
        %v598 = vpop.permute.xlu0 %597
        %s600 = sor.u32 256, 16
        %601 = vbcast.lane.b32.xlu0 %v591, %s600
        %v602 = vpop.permute.xlu0 %601
        %s604 = sor.u32 256, 24
        %605 = vbcast.lane.b32.xlu0 %v591, %s604
        %v606 = vpop.permute.xlu0 %605
        %v607 = vmul.f32 %v189, %v594
        %v608 = vmul.f32 %v190, %v594
        %v609 = vmul.f32 %v191, %v598
        %v610 = vmul.f32 %v192, %v598
        %v611 = vmul.f32 %v193, %v602
        %v612 = vmul.f32 %v194, %v602
        %v613 = vmul.f32 %v195, %v606
        %v614 = vmul.f32 %v196, %v606
        %615 = vst [vmem:[%s188] sm:$0xff] %v607
        %616 = vst [vmem:[%s188 + $0x8] sm:$0xff] %v608
        %617 = vst [vmem:[%s188 + $0x10] sm:$0xff] %v609
        %618 = vst [vmem:[%s188 + $0x18] sm:$0xff] %v610
        %619 = vst [vmem:[%s188 + $0x20] sm:$0xff] %v611
        %620 = vst [vmem:[%s188 + $0x28] sm:$0xff] %v612
        %621 = vst [vmem:[%s188 + $0x30] sm:$0xff] %v613
        %622 = vst [vmem:[%s188 + $0x38] sm:$0xff] %v614
        %s623 = sand.u32 %s96, 1
        %s624 = scalar_lea.sflag [#allocation4], %s623
        %s625 = sand.u32 %s96, 1
        %s626 = smul.addr %s625, 64
        %s627 = scalar_lea.vmem [#allocation5], %s626
        // Predicated region
        $region37: #{tpu_custom_call.1} parent=31 // pred_check
          %p628 = pneg %p106
        $region38: #{tpu_custom_call.1} parent=31 // pred_check_branch
          %630 = sbr.rel (%p628) target = $region40
        $region39: #{tpu_custom_call.1} parent=31 // pred_region
          %s632 = ssub.s32 1024, 1024
          %633 = vsyncadd %s624, %s632
          %s634 = smul.addr %s20, 8
          %s635 = smul.addr %s634, 128
          %s636 = scalar_lea.hbm %s3, %s635
          %s637 = sshll.u32 %s627, 4
          %s638 = int_to_ptr.vmem [resolvable:$true] %s637
          %643 = dma.vmem_to_hbm [thread:$0]  %s638, 1024, %s636, %s624, 256, 256, 16
        $region40: #{tpu_custom_call.1} parent=31 // pred_fallthru
          _
      $region32: #{tpu_custom_call.1} parent=5 // pred_fallthru
        _
      %p644 = scmp.le.s32.totalorder 2, %s15
      // Predicated region
      $region41: #{tpu_custom_call.1} parent=5 // pred_check
        %p645 = pneg %p644
      $region42: #{tpu_custom_call.1} parent=5 // pred_check_branch
        %647 = sbr.rel (%p645) target = $region44
      $region43: #{tpu_custom_call.1} parent=5 // pred_region
        %s648 = ssub.s32 %s15, 2
        // Predicated region
        $region45: #{tpu_custom_call.1} parent=43 // pred_check
          %p649 = pneg %p112
        $region46: #{tpu_custom_call.1} parent=43 // pred_check_branch
          %651 = sbr.rel (%p649) target = $region48
        $region47: #{tpu_custom_call.1} parent=43 // pred_region
          %s652 = sand.u32 %s97, 1
          %s653 = scalar_lea.sflag [#allocation4], %s652
          %s654 = sand.u32 %s97, 1
          %s655 = smul.addr %s654, 64
          %s656 = scalar_lea.vmem [#allocation5], %s655
          %657 = dma.done %s653, 1024
        $region48: #{tpu_custom_call.1} parent=43 // pred_fallthru
          _
      $region44: #{tpu_custom_call.1} parent=5 // pred_fallthru
        _
    $region6: #{tpu_custom_call.1} parent=1 // loop_footer
      %s19 = sadd.s32 1, %s15
    $region7: #{tpu_custom_call.1} parent=1 // loop_footer_branch
      %14 = sbr.rel target = $region3
    $region8: #{tpu_custom_call.1} parent=1 // loop_exit
      _
    %658 = vsyncpa [#allocation3], 1
    %s659 = scalar_lea.sflag [#allocation3], 1
    %660 = vsyncpa %s659, 1
    %661 = vsyncpa [#allocation4], 1
    %s662 = scalar_lea.sflag [#allocation4], 1
    %663 = vsyncpa %s662, 1

</llo_original>
